<compile_context>
chip_gen: v5e
topology: v5e:2x2
jax: 0.10.0
libtpu: 0.0.40
codegen_flags: <defaults>
</compile_context>

<pallas_src>
import jax
import jax.numpy as jnp
from jax.experimental import pallas as pl
from jax.experimental.pallas import tpu as pltpu


def _round_up(x: int, m: int) -> int:
    return ((x + m - 1) // m) * m


def _simple_nn_kernel(x_ref, w1_ref, b1_ref, w2_ref, b2_ref, o_ref):
    # x_ref/o_ref: (TILE_ROWS, LANES) f32 VMEM tiles, batch laid out lane-dense.
    # w1_ref/b1_ref/w2_ref: (10,) f32 SMEM; b2_ref: (1,) f32 SMEM.
    x = x_ref[...]
    acc = jnp.zeros_like(x)
    hidden = w1_ref.shape[0]  # static (10) -> fully unrolled VPU code
    for j in range(hidden):
        h_j = jnp.maximum(w1_ref[j] * x + b1_ref[j], 0.0)
        acc = acc + w2_ref[j] * h_j
    o_ref[...] = acc + b2_ref[0]


def simple_nn_forward(x, w1, b1, w2, b2, *, lanes=1024, max_tile_rows=512):
    """Forward pass of SimpleNN.

    x : [B, 1] (or [B]) float32
    w1: [1, 10], b1: [1, 10], w2: [10, 1], b2: [1, 1]   (weights stored [in, out])
    returns: [B, 1] float32
    """
    xf = x.reshape(-1).astype(jnp.float32)
    B = xf.shape[0]

    # Lane-dense slab: [rows_padded, lanes], lanes a multiple of 128,
    # rows padded to a multiple of the row-tile (itself a multiple of 8).
    lanes = _round_up(lanes, 128)
    rows = pl.cdiv(B, lanes)
    max_tile_rows = _round_up(max_tile_rows, 8)
    tile_rows = max_tile_rows if rows >= max_tile_rows else _round_up(rows, 8)
    rows_p = _round_up(rows, tile_rows)
    total = rows_p * lanes

    xf = jnp.pad(xf, (0, total - B))
    x2 = xf.reshape(rows_p, lanes)

    # Flatten weights; they ride along in SMEM (resident across the whole grid).
    w1f = w1.reshape(-1).astype(jnp.float32)  # (10,)
    b1f = b1.reshape(-1).astype(jnp.float32)  # (10,)
    w2f = w2.reshape(-1).astype(jnp.float32)  # (10,)
    b2f = b2.reshape(-1).astype(jnp.float32)  # (1,)

    grid = (rows_p // tile_rows,)

    out2 = pl.pallas_call(
        _simple_nn_kernel,
        out_shape=jax.ShapeDtypeStruct((rows_p, lanes), jnp.float32),
        grid=grid,
        in_specs=[
            pl.BlockSpec((tile_rows, lanes), lambda i: (i, 0)),
            pl.BlockSpec(memory_space=pltpu.MemorySpace.SMEM),
            pl.BlockSpec(memory_space=pltpu.MemorySpace.SMEM),
            pl.BlockSpec(memory_space=pltpu.MemorySpace.SMEM),
            pl.BlockSpec(memory_space=pltpu.MemorySpace.SMEM),
        ],
        out_specs=pl.BlockSpec((tile_rows, lanes), lambda i: (i, 0)),
        compiler_params=pltpu.CompilerParams(
            dimension_semantics=("parallel",),
        ),
    )(x2, w1f, b1f, w2f, b2f)

    y = out2.reshape(-1)[:B]
    return y.reshape(B, 1)


def init_params(key):
    """Deterministic init matching nn.Linear shapes: fc1 (1->10), fc2 (10->1)."""
    k1, k2, k3, k4 = jax.random.split(key, 4)
    # Stored as [in, out] (transposed vs. torch's [out, in]).
    w1 = jax.random.uniform(k1, (1, 10), jnp.float32, minval=-1.0, maxval=1.0)
    b1 = jax.random.uniform(k2, (1, 10), jnp.float32, minval=-1.0, maxval=1.0)
    w2 = jax.random.uniform(k3, (10, 1), jnp.float32,
                            minval=-(1.0 / jnp.sqrt(10.0)),
                            maxval=(1.0 / jnp.sqrt(10.0)))
    b2 = jax.random.uniform(k4, (1, 1), jnp.float32,
                            minval=-(1.0 / jnp.sqrt(10.0)),
                            maxval=(1.0 / jnp.sqrt(10.0)))
    return w1, b1, w2, b2


def _reference(x, w1, b1, w2, b2):
    return jnp.maximum(x @ w1 + b1, 0.0) @ w2 + b2


if __name__ == "__main__":
    key = jax.random.PRNGKey(0)
    kx1, kx2, kp = jax.random.split(key, 3)
    w1, b1, w2, b2 = init_params(kp)

    # Case 1: batch not a multiple of 128 (exercises the padding path).
    B1 = 1000
    x1 = jax.random.normal(kx1, (B1, 1), jnp.float32)
    out1 = jax.block_until_ready(simple_nn_forward(x1, w1, b1, w2, b2))
    ref1 = _reference(x1, w1, b1, w2, b2)
    assert out1.shape == (B1, 1)
    assert jnp.allclose(out1, ref1, atol=1e-5, rtol=1e-5)

    # Case 2: small tiles to exercise the multi-step pipelined grid.
    B2 = 4096
    x2 = jax.random.normal(kx2, (B2, 1), jnp.float32)
    out2 = jax.block_until_ready(
        simple_nn_forward(x2, w1, b1, w2, b2, lanes=256, max_tile_rows=8))
    ref2 = _reference(x2, w1, b1, w2, b2)
    assert out2.shape == (B2, 1)
    assert jnp.allclose(out2, ref2, atol=1e-5, rtol=1e-5)

    print("KERNEL_OK")
</pallas_src>

<mosaic_0001>
module attributes {stable_mosaic.version = 11 : i64} {
  func.func @_simple_nn_kernel(%arg0: i32, %arg1: memref<8x1024xf32, #tpu.memory_space<vmem>>, %arg2: memref<10xf32, #tpu.memory_space<smem>>, %arg3: memref<10xf32, #tpu.memory_space<smem>>, %arg4: memref<10xf32, #tpu.memory_space<smem>>, %arg5: memref<1xf32, #tpu.memory_space<smem>>, %arg6: memref<8x1024xf32, #tpu.memory_space<vmem>>) attributes {dimension_semantics = [#tpu.dimension_semantics<parallel>], iteration_bounds = array<i64: 1>, scalar_prefetch = 0 : i64, scratch_operands = 0 : i64, tpu.core_type = #tpu.core_type<tc>, window_params = [{transform_indices = @transform_0, window_bounds = array<i64: 8, 1024>}, {transform_indices = @transform_1, window_bounds = array<i64: 10>}, {transform_indices = @transform_2, window_bounds = array<i64: 10>}, {transform_indices = @transform_3, window_bounds = array<i64: 10>}, {transform_indices = @transform_4, window_bounds = array<i64: 1>}, {transform_indices = @transform_5, window_bounds = array<i64: 8, 1024>}]} {
    %c0 = arith.constant 0 : index
    %c0_0 = arith.constant 0 : index
    %0 = vector.load %arg1[%c0, %c0_0] : memref<8x1024xf32, #tpu.memory_space<vmem>>, vector<8x1024xf32>
    %cst = arith.constant 0.000000e+00 : f32
    %1 = vector.broadcast %cst : f32 to vector<8x1024xf32>
    %c0_1 = arith.constant 0 : index
    %2 = memref.load %arg2[%c0_1] : memref<10xf32, #tpu.memory_space<smem>>
    %3 = vector.broadcast %2 : f32 to vector<8x1024xf32>
    %4 = arith.mulf %3, %0 : vector<8x1024xf32>
    %c0_2 = arith.constant 0 : index
    %5 = memref.load %arg3[%c0_2] : memref<10xf32, #tpu.memory_space<smem>>
    %6 = vector.broadcast %5 : f32 to vector<8x1024xf32>
    %7 = arith.addf %4, %6 : vector<8x1024xf32>
    %cst_3 = arith.constant 0.000000e+00 : f32
    %8 = vector.broadcast %cst_3 : f32 to vector<8x1024xf32>
    %9 = arith.maximumf %7, %8 : vector<8x1024xf32>
    %c0_4 = arith.constant 0 : index
    %10 = memref.load %arg4[%c0_4] : memref<10xf32, #tpu.memory_space<smem>>
    %11 = vector.broadcast %10 : f32 to vector<8x1024xf32>
    %12 = arith.mulf %11, %9 : vector<8x1024xf32>
    %13 = arith.addf %1, %12 : vector<8x1024xf32>
    %c1 = arith.constant 1 : index
    %14 = memref.load %arg2[%c1] : memref<10xf32, #tpu.memory_space<smem>>
    %15 = vector.broadcast %14 : f32 to vector<8x1024xf32>
    %16 = arith.mulf %15, %0 : vector<8x1024xf32>
    %c1_5 = arith.constant 1 : index
    %17 = memref.load %arg3[%c1_5] : memref<10xf32, #tpu.memory_space<smem>>
    %18 = vector.broadcast %17 : f32 to vector<8x1024xf32>
    %19 = arith.addf %16, %18 : vector<8x1024xf32>
    %cst_6 = arith.constant 0.000000e+00 : f32
    %20 = vector.broadcast %cst_6 : f32 to vector<8x1024xf32>
    %21 = arith.maximumf %19, %20 : vector<8x1024xf32>
    %c1_7 = arith.constant 1 : index
    %22 = memref.load %arg4[%c1_7] : memref<10xf32, #tpu.memory_space<smem>>
    %23 = vector.broadcast %22 : f32 to vector<8x1024xf32>
    %24 = arith.mulf %23, %21 : vector<8x1024xf32>
    %25 = arith.addf %13, %24 : vector<8x1024xf32>
    %c2 = arith.constant 2 : index
    %26 = memref.load %arg2[%c2] : memref<10xf32, #tpu.memory_space<smem>>
    %27 = vector.broadcast %26 : f32 to vector<8x1024xf32>
    %28 = arith.mulf %27, %0 : vector<8x1024xf32>
    %c2_8 = arith.constant 2 : index
    %29 = memref.load %arg3[%c2_8] : memref<10xf32, #tpu.memory_space<smem>>
    %30 = vector.broadcast %29 : f32 to vector<8x1024xf32>
    %31 = arith.addf %28, %30 : vector<8x1024xf32>
    %cst_9 = arith.constant 0.000000e+00 : f32
    %32 = vector.broadcast %cst_9 : f32 to vector<8x1024xf32>
    %33 = arith.maximumf %31, %32 : vector<8x1024xf32>
    %c2_10 = arith.constant 2 : index
    %34 = memref.load %arg4[%c2_10] : memref<10xf32, #tpu.memory_space<smem>>
    %35 = vector.broadcast %34 : f32 to vector<8x1024xf32>
    %36 = arith.mulf %35, %33 : vector<8x1024xf32>
    %37 = arith.addf %25, %36 : vector<8x1024xf32>
    %c3 = arith.constant 3 : index
    %38 = memref.load %arg2[%c3] : memref<10xf32, #tpu.memory_space<smem>>
    %39 = vector.broadcast %38 : f32 to vector<8x1024xf32>
    %40 = arith.mulf %39, %0 : vector<8x1024xf32>
    %c3_11 = arith.constant 3 : index
    %41 = memref.load %arg3[%c3_11] : memref<10xf32, #tpu.memory_space<smem>>
    %42 = vector.broadcast %41 : f32 to vector<8x1024xf32>
    %43 = arith.addf %40, %42 : vector<8x1024xf32>
    %cst_12 = arith.constant 0.000000e+00 : f32
    %44 = vector.broadcast %cst_12 : f32 to vector<8x1024xf32>
    %45 = arith.maximumf %43, %44 : vector<8x1024xf32>
    %c3_13 = arith.constant 3 : index
    %46 = memref.load %arg4[%c3_13] : memref<10xf32, #tpu.memory_space<smem>>
    %47 = vector.broadcast %46 : f32 to vector<8x1024xf32>
    %48 = arith.mulf %47, %45 : vector<8x1024xf32>
    %49 = arith.addf %37, %48 : vector<8x1024xf32>
    %c4 = arith.constant 4 : index
    %50 = memref.load %arg2[%c4] : memref<10xf32, #tpu.memory_space<smem>>
    %51 = vector.broadcast %50 : f32 to vector<8x1024xf32>
    %52 = arith.mulf %51, %0 : vector<8x1024xf32>
    %c4_14 = arith.constant 4 : index
    %53 = memref.load %arg3[%c4_14] : memref<10xf32, #tpu.memory_space<smem>>
    %54 = vector.broadcast %53 : f32 to vector<8x1024xf32>
    %55 = arith.addf %52, %54 : vector<8x1024xf32>
    %cst_15 = arith.constant 0.000000e+00 : f32
    %56 = vector.broadcast %cst_15 : f32 to vector<8x1024xf32>
    %57 = arith.maximumf %55, %56 : vector<8x1024xf32>
    %c4_16 = arith.constant 4 : index
    %58 = memref.load %arg4[%c4_16] : memref<10xf32, #tpu.memory_space<smem>>
    %59 = vector.broadcast %58 : f32 to vector<8x1024xf32>
    %60 = arith.mulf %59, %57 : vector<8x1024xf32>
    %61 = arith.addf %49, %60 : vector<8x1024xf32>
    %c5 = arith.constant 5 : index
    %62 = memref.load %arg2[%c5] : memref<10xf32, #tpu.memory_space<smem>>
    %63 = vector.broadcast %62 : f32 to vector<8x1024xf32>
    %64 = arith.mulf %63, %0 : vector<8x1024xf32>
    %c5_17 = arith.constant 5 : index
    %65 = memref.load %arg3[%c5_17] : memref<10xf32, #tpu.memory_space<smem>>
    %66 = vector.broadcast %65 : f32 to vector<8x1024xf32>
    %67 = arith.addf %64, %66 : vector<8x1024xf32>
    %cst_18 = arith.constant 0.000000e+00 : f32
    %68 = vector.broadcast %cst_18 : f32 to vector<8x1024xf32>
    %69 = arith.maximumf %67, %68 : vector<8x1024xf32>
    %c5_19 = arith.constant 5 : index
    %70 = memref.load %arg4[%c5_19] : memref<10xf32, #tpu.memory_space<smem>>
    %71 = vector.broadcast %70 : f32 to vector<8x1024xf32>
    %72 = arith.mulf %71, %69 : vector<8x1024xf32>
    %73 = arith.addf %61, %72 : vector<8x1024xf32>
    %c6 = arith.constant 6 : index
    %74 = memref.load %arg2[%c6] : memref<10xf32, #tpu.memory_space<smem>>
    %75 = vector.broadcast %74 : f32 to vector<8x1024xf32>
    %76 = arith.mulf %75, %0 : vector<8x1024xf32>
    %c6_20 = arith.constant 6 : index
    %77 = memref.load %arg3[%c6_20] : memref<10xf32, #tpu.memory_space<smem>>
    %78 = vector.broadcast %77 : f32 to vector<8x1024xf32>
    %79 = arith.addf %76, %78 : vector<8x1024xf32>
    %cst_21 = arith.constant 0.000000e+00 : f32
    %80 = vector.broadcast %cst_21 : f32 to vector<8x1024xf32>
    %81 = arith.maximumf %79, %80 : vector<8x1024xf32>
    %c6_22 = arith.constant 6 : index
    %82 = memref.load %arg4[%c6_22] : memref<10xf32, #tpu.memory_space<smem>>
    %83 = vector.broadcast %82 : f32 to vector<8x1024xf32>
    %84 = arith.mulf %83, %81 : vector<8x1024xf32>
    %85 = arith.addf %73, %84 : vector<8x1024xf32>
    %c7 = arith.constant 7 : index
    %86 = memref.load %arg2[%c7] : memref<10xf32, #tpu.memory_space<smem>>
    %87 = vector.broadcast %86 : f32 to vector<8x1024xf32>
    %88 = arith.mulf %87, %0 : vector<8x1024xf32>
    %c7_23 = arith.constant 7 : index
    %89 = memref.load %arg3[%c7_23] : memref<10xf32, #tpu.memory_space<smem>>
    %90 = vector.broadcast %89 : f32 to vector<8x1024xf32>
    %91 = arith.addf %88, %90 : vector<8x1024xf32>
    %cst_24 = arith.constant 0.000000e+00 : f32
    %92 = vector.broadcast %cst_24 : f32 to vector<8x1024xf32>
    %93 = arith.maximumf %91, %92 : vector<8x1024xf32>
    %c7_25 = arith.constant 7 : index
    %94 = memref.load %arg4[%c7_25] : memref<10xf32, #tpu.memory_space<smem>>
    %95 = vector.broadcast %94 : f32 to vector<8x1024xf32>
    %96 = arith.mulf %95, %93 : vector<8x1024xf32>
    %97 = arith.addf %85, %96 : vector<8x1024xf32>
    %c8 = arith.constant 8 : index
    %98 = memref.load %arg2[%c8] : memref<10xf32, #tpu.memory_space<smem>>
    %99 = vector.broadcast %98 : f32 to vector<8x1024xf32>
    %100 = arith.mulf %99, %0 : vector<8x1024xf32>
    %c8_26 = arith.constant 8 : index
    %101 = memref.load %arg3[%c8_26] : memref<10xf32, #tpu.memory_space<smem>>
    %102 = vector.broadcast %101 : f32 to vector<8x1024xf32>
    %103 = arith.addf %100, %102 : vector<8x1024xf32>
    %cst_27 = arith.constant 0.000000e+00 : f32
    %104 = vector.broadcast %cst_27 : f32 to vector<8x1024xf32>
    %105 = arith.maximumf %103, %104 : vector<8x1024xf32>
    %c8_28 = arith.constant 8 : index
    %106 = memref.load %arg4[%c8_28] : memref<10xf32, #tpu.memory_space<smem>>
    %107 = vector.broadcast %106 : f32 to vector<8x1024xf32>
    %108 = arith.mulf %107, %105 : vector<8x1024xf32>
    %109 = arith.addf %97, %108 : vector<8x1024xf32>
    %c9 = arith.constant 9 : index
    %110 = memref.load %arg2[%c9] : memref<10xf32, #tpu.memory_space<smem>>
    %111 = vector.broadcast %110 : f32 to vector<8x1024xf32>
    %112 = arith.mulf %111, %0 : vector<8x1024xf32>
    %c9_29 = arith.constant 9 : index
    %113 = memref.load %arg3[%c9_29] : memref<10xf32, #tpu.memory_space<smem>>
    %114 = vector.broadcast %113 : f32 to vector<8x1024xf32>
    %115 = arith.addf %112, %114 : vector<8x1024xf32>
    %cst_30 = arith.constant 0.000000e+00 : f32
    %116 = vector.broadcast %cst_30 : f32 to vector<8x1024xf32>
    %117 = arith.maximumf %115, %116 : vector<8x1024xf32>
    %c9_31 = arith.constant 9 : index
    %118 = memref.load %arg4[%c9_31] : memref<10xf32, #tpu.memory_space<smem>>
    %119 = vector.broadcast %118 : f32 to vector<8x1024xf32>
    %120 = arith.mulf %119, %117 : vector<8x1024xf32>
    %121 = arith.addf %109, %120 : vector<8x1024xf32>
    %c0_32 = arith.constant 0 : index
    %122 = memref.load %arg5[%c0_32] : memref<1xf32, #tpu.memory_space<smem>>
    %123 = vector.broadcast %122 : f32 to vector<8x1024xf32>
    %124 = arith.addf %121, %123 : vector<8x1024xf32>
    %c0_33 = arith.constant 0 : index
    %c0_34 = arith.constant 0 : index
    %125 = vector.load %arg6[%c0_33, %c0_34] : memref<8x1024xf32, #tpu.memory_space<vmem>>, vector<8x1024xf32>
    tpu.vector_store %arg6[%c0_33, %c0_34], %124 {strides = array<i32>} : memref<8x1024xf32, #tpu.memory_space<vmem>>, vector<8x1024xf32>,
    return
  }
  func.func @transform_0(%arg0: i32) -> (i32, i32) {
    %c0_i32 = arith.constant 0 : i32
    %c0_i32_0 = arith.constant 0 : i32
    return %arg0, %c0_i32 : i32, i32
  }
  func.func @transform_1(%arg0: i32) -> i32 {
    %c0_i32 = arith.constant 0 : i32
    %c0_i32_0 = arith.constant 0 : i32
    return %c0_i32 : i32
  }
  func.func @transform_2(%arg0: i32) -> i32 {
    %c0_i32 = arith.constant 0 : i32
    %c0_i32_0 = arith.constant 0 : i32
    return %c0_i32 : i32
  }
  func.func @transform_3(%arg0: i32) -> i32 {
    %c0_i32 = arith.constant 0 : i32
    %c0_i32_0 = arith.constant 0 : i32
    return %c0_i32 : i32
  }
  func.func @transform_4(%arg0: i32) -> i32 {
    %c0_i32 = arith.constant 0 : i32
    %c0_i32_0 = arith.constant 0 : i32
    return %c0_i32 : i32
  }
  func.func @transform_5(%arg0: i32) -> (i32, i32) {
    %c0_i32 = arith.constant 0 : i32
    %c0_i32_0 = arith.constant 0 : i32
    return %arg0, %c0_i32 : i32, i32
  }
}

</mosaic_0001>

<llo_original>
// kernel: tpu_custom_call.1
$region0: #{tpu_custom_call.1}
  #allocation0 [shape = 'u32[]', space=smem, size = 0x4, offset = 0x4, fixed_abs, tag = 'smem constant byte address 0x4 - core index']
  #allocation1 [shape = 'u32[72,128]{1,0:T(1,128)}', space=vmem, size = 0x9000, scoped, tag = 'internal scratch']
  #allocation2 [shape = 'f32[1]{0:T(128)S(6)}', space=smem, size = 0x200, scoped, tag = 'scoped memory for tpu_custom_call.1']
  %s0 = inlined_call_operand.hbm [shape: f32[8,1024], index: 0, kind: input, shape index: {}]
  %s1 = inlined_call_operand.vmem [shape: f32[10], index: 1, kind: input, shape index: {}]
  %s2 = inlined_call_operand.vmem [shape: f32[10], index: 2, kind: input, shape index: {}]
  %s3 = inlined_call_operand.vmem [shape: f32[10], index: 3, kind: input, shape index: {}]
  %s4 = inlined_call_operand.<no memory space> [shape: f32[1], index: 4, kind: input, shape index: {}]
  %s5 = inlined_call_operand.hbm [shape: f32[8,1024], index: 5, kind: output, shape index: {}]
  %s6 = sld [smem:[#allocation0]]
  $region46: #{tpu_custom_call.1} parent=0
    _
  %s8 = ssub.s32 1, %s6
  %s9 = scalar_select 0, %s8, %s6
  %10 = sst [smem:[#allocation2]] %s4
  $region1: #{tpu_custom_call.1} parent=0
    #allocation3 [shape = 'u8[32768]{0}', space=vmem, size = 0x8000, scoped, tag = 'input window, operand 0, single buffered']
    #allocation4 [shape = 's32[1]{0}', space=sflag, size = 0x4, scoped, tag = 'scoped memory for tpu_custom_call.1']
    #allocation5 [shape = 's32[1]{0}', space=sflag, size = 0x4, scoped, tag = 'scoped memory for tpu_custom_call.1']
    #allocation6 [shape = 's32[1]{0}', space=sflag, size = 0x4, scoped, tag = 'scoped memory for tpu_custom_call.1']
    #allocation7 [shape = 'u8[512]{0}', space=smem, size = 0x200, scoped, tag = 'input window, operand 1, single buffered']
    #allocation8 [shape = 'u8[512]{0}', space=smem, size = 0x200, scoped, tag = 'input window, operand 2, single buffered']
    #allocation9 [shape = 's32[1]{0}', space=sflag, size = 0x4, scoped, tag = 'scoped memory for tpu_custom_call.1']
    #allocation10 [shape = 'u8[512]{0}', space=smem, size = 0x200, scoped, tag = 'input window, operand 3, single buffered']
    #allocation11 [shape = 'u8[32768]{0}', space=vmem, size = 0x8000, scoped, tag = 'output window, operand 0, single buffered']
    %11 = vsyncpa [#allocation4], 0
    %12 = vsyncpa [#allocation6], 0
    %13 = vsyncpa [#allocation9], 0
    %14 = vsyncpa [#allocation5], 0
    // Predicated region
    $region2: #{tpu_custom_call.1} parent=1 // pred_check
      _
    $region3: #{tpu_custom_call.1} parent=1 // pred_check_branch
      %16 = sbr.rel (0) target = $region5
    $region4: #{tpu_custom_call.1} parent=1 // pred_region
      %18 = vsyncadd [#allocation4], 0
      %s20 = sshll.u32 %s0, 4
      %s21 = int_to_ptr.hbm [resolvable:$true] %s20
      %s22 = sshll.u32 [#allocation3], 4
      %s23 = int_to_ptr.vmem [resolvable:$true] %s22
      %25 = dma.hbm_to_vmem [thread:$0]  %s21, 1024, %s23, [#allocation4]
    $region5: #{tpu_custom_call.1} parent=1 // pred_fallthru
      _
    // Predicated region
    $region6: #{tpu_custom_call.1} parent=1 // pred_check
      _
    $region7: #{tpu_custom_call.1} parent=1 // pred_check_branch
      %27 = sbr.rel (0) target = $region9
    $region8: #{tpu_custom_call.1} parent=1 // pred_region
      %29 = vsyncadd [#allocation6], 0
      %s31 = sshll.u32 %s1, 4
      %s32 = int_to_ptr.vmem [resolvable:$true] %s31
      %34 = dma.vmem_to_smem %s32, 16, [#allocation7], [#allocation6]
    $region9: #{tpu_custom_call.1} parent=1 // pred_fallthru
      _
    // Predicated region
    $region10: #{tpu_custom_call.1} parent=1 // pred_check
      _
    $region11: #{tpu_custom_call.1} parent=1 // pred_check_branch
      %36 = sbr.rel (0) target = $region13
    $region12: #{tpu_custom_call.1} parent=1 // pred_region
      %38 = vsyncadd [#allocation9], 0
      %s40 = sshll.u32 %s2, 4
      %s41 = int_to_ptr.vmem [resolvable:$true] %s40
      %43 = dma.vmem_to_smem %s41, 16, [#allocation8], [#allocation9]
    $region13: #{tpu_custom_call.1} parent=1 // pred_fallthru
      _
    // Predicated region
    $region14: #{tpu_custom_call.1} parent=1 // pred_check
      _
    $region15: #{tpu_custom_call.1} parent=1 // pred_check_branch
      %45 = sbr.rel (0) target = $region17
    $region16: #{tpu_custom_call.1} parent=1 // pred_region
      %47 = vsyncadd [#allocation9], 0
      %s49 = sshll.u32 %s3, 4
      %s50 = int_to_ptr.vmem [resolvable:$true] %s49
      %52 = dma.vmem_to_smem %s50, 16, [#allocation10], [#allocation9]
    $region17: #{tpu_custom_call.1} parent=1 // pred_fallthru
      _
    // Predicated region
    $region18: #{tpu_custom_call.1} parent=1 // pred_check
      _
    $region19: #{tpu_custom_call.1} parent=1 // pred_check_branch
      %54 = sbr.rel (0) target = $region21
    $region20: #{tpu_custom_call.1} parent=1 // pred_region
      _
    $region21: #{tpu_custom_call.1} parent=1 // pred_fallthru
      _
    // Predicated region
    $region22: #{tpu_custom_call.1} parent=1 // pred_check
      _
    $region23: #{tpu_custom_call.1} parent=1 // pred_check_branch
      %56 = sbr.rel (0) target = $region25
    $region24: #{tpu_custom_call.1} parent=1 // pred_region
      %58 = dma.done [#allocation4], 1024
    $region25: #{tpu_custom_call.1} parent=1 // pred_fallthru
      _
    // Predicated region
    $region26: #{tpu_custom_call.1} parent=1 // pred_check
      _
    $region27: #{tpu_custom_call.1} parent=1 // pred_check_branch
      %60 = sbr.rel (0) target = $region29
    $region28: #{tpu_custom_call.1} parent=1 // pred_region
      %62 = dma.done [#allocation6], 16
    $region29: #{tpu_custom_call.1} parent=1 // pred_fallthru
      _
    // Predicated region
    $region30: #{tpu_custom_call.1} parent=1 // pred_check
      _
    $region31: #{tpu_custom_call.1} parent=1 // pred_check_branch
      %64 = sbr.rel (0) target = $region33
    $region32: #{tpu_custom_call.1} parent=1 // pred_region
      %66 = dma.done [#allocation9], 16
    $region33: #{tpu_custom_call.1} parent=1 // pred_fallthru
      _
    // Predicated region
    $region34: #{tpu_custom_call.1} parent=1 // pred_check
      _
    $region35: #{tpu_custom_call.1} parent=1 // pred_check_branch
      %68 = sbr.rel (0) target = $region37
    $region36: #{tpu_custom_call.1} parent=1 // pred_region
      %70 = dma.done [#allocation9], 16
    $region37: #{tpu_custom_call.1} parent=1 // pred_fallthru
      _
    %71 = sfence
    %v72 = vld [vmem:[#allocation3] sm:$0xff]
    %v73 = vld [vmem:[#allocation3 + $0x8] sm:$0xff]
    %v74 = vld [vmem:[#allocation3 + $0x10] sm:$0xff]
    %v75 = vld [vmem:[#allocation3 + $0x18] sm:$0xff]
    %v76 = vld [vmem:[#allocation3 + $0x20] sm:$0xff]
    %v77 = vld [vmem:[#allocation3 + $0x28] sm:$0xff]
    %v78 = vld [vmem:[#allocation3 + $0x30] sm:$0xff]
    %v79 = vld [vmem:[#allocation3 + $0x38] sm:$0xff]
    %s80 = sld [smem:[#allocation7]]
    %v81 = vstv %s80
    %v82 = vmul.f32 %v81, %v72
    %v83 = vmul.f32 %v81, %v73
    %v84 = vmul.f32 %v81, %v74
    %v85 = vmul.f32 %v81, %v75
    %v86 = vmul.f32 %v81, %v76
    %v87 = vmul.f32 %v81, %v77
    %v88 = vmul.f32 %v81, %v78
    %v89 = vmul.f32 %v81, %v79
    %s90 = sld [smem:[#allocation8]]
    %v91 = vstv %s90
    %v92 = vadd.f32 %v82, %v91
    %v93 = vadd.f32 %v83, %v91
    %v94 = vadd.f32 %v84, %v91
    %v95 = vadd.f32 %v85, %v91
    %v96 = vadd.f32 %v86, %v91
    %v97 = vadd.f32 %v87, %v91
    %v98 = vadd.f32 %v88, %v91
    %v99 = vadd.f32 %v89, %v91
    %v100 = vmax.f32 %v92, 0.0
    %v101 = vmax.f32 %v93, 0.0
    %v102 = vmax.f32 %v94, 0.0
    %v103 = vmax.f32 %v95, 0.0
    %v104 = vmax.f32 %v96, 0.0
    %v105 = vmax.f32 %v97, 0.0
    %v106 = vmax.f32 %v98, 0.0
    %v107 = vmax.f32 %v99, 0.0
    %s108 = sld [smem:[#allocation10]]
    %v109 = vstv %s108
    %v110 = vmul.f32 %v109, %v100
    %v111 = vmul.f32 %v109, %v101
    %v112 = vmul.f32 %v109, %v102
    %v113 = vmul.f32 %v109, %v103
    %v114 = vmul.f32 %v109, %v104
    %v115 = vmul.f32 %v109, %v105
    %v116 = vmul.f32 %v109, %v106
    %v117 = vmul.f32 %v109, %v107
    %v118 = vadd.f32 %v110, 0.0
    %v119 = vadd.f32 %v111, 0.0
    %v120 = vadd.f32 %v112, 0.0
    %v121 = vadd.f32 %v113, 0.0
    %v122 = vadd.f32 %v114, 0.0
    %v123 = vadd.f32 %v115, 0.0
    %v124 = vadd.f32 %v116, 0.0
    %v125 = vadd.f32 %v117, 0.0
    %s126 = sld [smem:[#allocation7 + $0x1]]
    %v127 = vstv %s126
    %v128 = vmul.f32 %v127, %v72
    %v129 = vmul.f32 %v127, %v73
    %v130 = vmul.f32 %v127, %v74
    %v131 = vmul.f32 %v127, %v75
    %v132 = vmul.f32 %v127, %v76
    %v133 = vmul.f32 %v127, %v77
    %v134 = vmul.f32 %v127, %v78
    %v135 = vmul.f32 %v127, %v79
    %s136 = sld [smem:[#allocation8 + $0x1]]
    %v137 = vstv %s136
    %v138 = vadd.f32 %v128, %v137
    %v139 = vadd.f32 %v129, %v137
    %v140 = vadd.f32 %v130, %v137
    %v141 = vadd.f32 %v131, %v137
    %v142 = vadd.f32 %v132, %v137
    %v143 = vadd.f32 %v133, %v137
    %v144 = vadd.f32 %v134, %v137
    %v145 = vadd.f32 %v135, %v137
    %v146 = vmax.f32 %v138, 0.0
    %v147 = vmax.f32 %v139, 0.0
    %v148 = vmax.f32 %v140, 0.0
    %v149 = vmax.f32 %v141, 0.0
    %v150 = vmax.f32 %v142, 0.0
    %v151 = vmax.f32 %v143, 0.0
    %v152 = vmax.f32 %v144, 0.0
    %v153 = vmax.f32 %v145, 0.0
    %s154 = sld [smem:[#allocation10 + $0x1]]
    %v155 = vstv %s154
    %v156 = vmul.f32 %v155, %v146
    %v157 = vmul.f32 %v155, %v147
    %v158 = vmul.f32 %v155, %v148
    %v159 = vmul.f32 %v155, %v149
    %v160 = vmul.f32 %v155, %v150
    %v161 = vmul.f32 %v155, %v151
    %v162 = vmul.f32 %v155, %v152
    %v163 = vmul.f32 %v155, %v153
    %v164 = vadd.f32 %v118, %v156
    %v165 = vadd.f32 %v119, %v157
    %v166 = vadd.f32 %v120, %v158
    %v167 = vadd.f32 %v121, %v159
    %v168 = vadd.f32 %v122, %v160
    %v169 = vadd.f32 %v123, %v161
    %v170 = vadd.f32 %v124, %v162
    %v171 = vadd.f32 %v125, %v163
    %s172 = sld [smem:[#allocation7 + $0x2]]
    %v173 = vstv %s172
    %v174 = vmul.f32 %v173, %v72
    %v175 = vmul.f32 %v173, %v73
    %v176 = vmul.f32 %v173, %v74
    %v177 = vmul.f32 %v173, %v75
    %v178 = vmul.f32 %v173, %v76
    %v179 = vmul.f32 %v173, %v77
    %v180 = vmul.f32 %v173, %v78
    %v181 = vmul.f32 %v173, %v79
    %s182 = sld [smem:[#allocation8 + $0x2]]
    %v183 = vstv %s182
    %v184 = vadd.f32 %v174, %v183
    %v185 = vadd.f32 %v175, %v183
    %v186 = vadd.f32 %v176, %v183
    %v187 = vadd.f32 %v177, %v183
    %v188 = vadd.f32 %v178, %v183
    %v189 = vadd.f32 %v179, %v183
    %v190 = vadd.f32 %v180, %v183
    %v191 = vadd.f32 %v181, %v183
    %v192 = vmax.f32 %v184, 0.0
    %v193 = vmax.f32 %v185, 0.0
    %v194 = vmax.f32 %v186, 0.0
    %v195 = vmax.f32 %v187, 0.0
    %v196 = vmax.f32 %v188, 0.0
    %v197 = vmax.f32 %v189, 0.0
    %v198 = vmax.f32 %v190, 0.0
    %v199 = vmax.f32 %v191, 0.0
    %s200 = sld [smem:[#allocation10 + $0x2]]
    %v201 = vstv %s200
    %v202 = vmul.f32 %v201, %v192
    %v203 = vmul.f32 %v201, %v193
    %v204 = vmul.f32 %v201, %v194
    %v205 = vmul.f32 %v201, %v195
    %v206 = vmul.f32 %v201, %v196
    %v207 = vmul.f32 %v201, %v197
    %v208 = vmul.f32 %v201, %v198
    %v209 = vmul.f32 %v201, %v199
    %v210 = vadd.f32 %v164, %v202
    %v211 = vadd.f32 %v165, %v203
    %v212 = vadd.f32 %v166, %v204
    %v213 = vadd.f32 %v167, %v205
    %v214 = vadd.f32 %v168, %v206
    %v215 = vadd.f32 %v169, %v207
    %v216 = vadd.f32 %v170, %v208
    %v217 = vadd.f32 %v171, %v209
    %s218 = sld [smem:[#allocation7 + $0x3]]
    %v219 = vstv %s218
    %v220 = vmul.f32 %v219, %v72
    %v221 = vmul.f32 %v219, %v73
    %v222 = vmul.f32 %v219, %v74
    %v223 = vmul.f32 %v219, %v75
    %v224 = vmul.f32 %v219, %v76
    %v225 = vmul.f32 %v219, %v77
    %v226 = vmul.f32 %v219, %v78
    %v227 = vmul.f32 %v219, %v79
    %s228 = sld [smem:[#allocation8 + $0x3]]
    %v229 = vstv %s228
    %v230 = vadd.f32 %v220, %v229
    %v231 = vadd.f32 %v221, %v229
    %v232 = vadd.f32 %v222, %v229
    %v233 = vadd.f32 %v223, %v229
    %v234 = vadd.f32 %v224, %v229
    %v235 = vadd.f32 %v225, %v229
    %v236 = vadd.f32 %v226, %v229
    %v237 = vadd.f32 %v227, %v229
    %v238 = vmax.f32 %v230, 0.0
    %v239 = vmax.f32 %v231, 0.0
    %v240 = vmax.f32 %v232, 0.0
    %v241 = vmax.f32 %v233, 0.0
    %v242 = vmax.f32 %v234, 0.0
    %v243 = vmax.f32 %v235, 0.0
    %v244 = vmax.f32 %v236, 0.0
    %v245 = vmax.f32 %v237, 0.0
    %s246 = sld [smem:[#allocation10 + $0x3]]
    %v247 = vstv %s246
    %v248 = vmul.f32 %v247, %v238
    %v249 = vmul.f32 %v247, %v239
    %v250 = vmul.f32 %v247, %v240
    %v251 = vmul.f32 %v247, %v241
    %v252 = vmul.f32 %v247, %v242
    %v253 = vmul.f32 %v247, %v243
    %v254 = vmul.f32 %v247, %v244
    %v255 = vmul.f32 %v247, %v245
    %v256 = vadd.f32 %v210, %v248
    %v257 = vadd.f32 %v211, %v249
    %v258 = vadd.f32 %v212, %v250
    %v259 = vadd.f32 %v213, %v251
    %v260 = vadd.f32 %v214, %v252
    %v261 = vadd.f32 %v215, %v253
    %v262 = vadd.f32 %v216, %v254
    %v263 = vadd.f32 %v217, %v255
    %s264 = sld [smem:[#allocation7 + $0x4]]
    %v265 = vstv %s264
    %v266 = vmul.f32 %v265, %v72
    %v267 = vmul.f32 %v265, %v73
    %v268 = vmul.f32 %v265, %v74
    %v269 = vmul.f32 %v265, %v75
    %v270 = vmul.f32 %v265, %v76
    %v271 = vmul.f32 %v265, %v77
    %v272 = vmul.f32 %v265, %v78
    %v273 = vmul.f32 %v265, %v79
    %s274 = sld [smem:[#allocation8 + $0x4]]
    %v275 = vstv %s274
    %v276 = vadd.f32 %v266, %v275
    %v277 = vadd.f32 %v267, %v275
    %v278 = vadd.f32 %v268, %v275
    %v279 = vadd.f32 %v269, %v275
    %v280 = vadd.f32 %v270, %v275
    %v281 = vadd.f32 %v271, %v275
    %v282 = vadd.f32 %v272, %v275
    %v283 = vadd.f32 %v273, %v275
    %v284 = vmax.f32 %v276, 0.0
    %v285 = vmax.f32 %v277, 0.0
    %v286 = vmax.f32 %v278, 0.0
    %v287 = vmax.f32 %v279, 0.0
    %v288 = vmax.f32 %v280, 0.0
    %v289 = vmax.f32 %v281, 0.0
    %v290 = vmax.f32 %v282, 0.0
    %v291 = vmax.f32 %v283, 0.0
    %s292 = sld [smem:[#allocation10 + $0x4]]
    %v293 = vstv %s292
    %v294 = vmul.f32 %v293, %v284
    %v295 = vmul.f32 %v293, %v285
    %v296 = vmul.f32 %v293, %v286
    %v297 = vmul.f32 %v293, %v287
    %v298 = vmul.f32 %v293, %v288
    %v299 = vmul.f32 %v293, %v289
    %v300 = vmul.f32 %v293, %v290
    %v301 = vmul.f32 %v293, %v291
    %v302 = vadd.f32 %v256, %v294
    %v303 = vadd.f32 %v257, %v295
    %v304 = vadd.f32 %v258, %v296
    %v305 = vadd.f32 %v259, %v297
    %v306 = vadd.f32 %v260, %v298
    %v307 = vadd.f32 %v261, %v299
    %v308 = vadd.f32 %v262, %v300
    %v309 = vadd.f32 %v263, %v301
    %s310 = sld [smem:[#allocation7 + $0x5]]
    %v311 = vstv %s310
    %v312 = vmul.f32 %v311, %v72
    %v313 = vmul.f32 %v311, %v73
    %v314 = vmul.f32 %v311, %v74
    %v315 = vmul.f32 %v311, %v75
    %v316 = vmul.f32 %v311, %v76
    %v317 = vmul.f32 %v311, %v77
    %v318 = vmul.f32 %v311, %v78
    %v319 = vmul.f32 %v311, %v79
    %s320 = sld [smem:[#allocation8 + $0x5]]
    %v321 = vstv %s320
    %v322 = vadd.f32 %v312, %v321
    %v323 = vadd.f32 %v313, %v321
    %v324 = vadd.f32 %v314, %v321
    %v325 = vadd.f32 %v315, %v321
    %v326 = vadd.f32 %v316, %v321
    %v327 = vadd.f32 %v317, %v321
    %v328 = vadd.f32 %v318, %v321
    %v329 = vadd.f32 %v319, %v321
    %v330 = vmax.f32 %v322, 0.0
    %v331 = vmax.f32 %v323, 0.0
    %v332 = vmax.f32 %v324, 0.0
    %v333 = vmax.f32 %v325, 0.0
    %v334 = vmax.f32 %v326, 0.0
    %v335 = vmax.f32 %v327, 0.0
    %v336 = vmax.f32 %v328, 0.0
    %v337 = vmax.f32 %v329, 0.0
    %s338 = sld [smem:[#allocation10 + $0x5]]
    %v339 = vstv %s338
    %v340 = vmul.f32 %v339, %v330
    %v341 = vmul.f32 %v339, %v331
    %v342 = vmul.f32 %v339, %v332
    %v343 = vmul.f32 %v339, %v333
    %v344 = vmul.f32 %v339, %v334
    %v345 = vmul.f32 %v339, %v335
    %v346 = vmul.f32 %v339, %v336
    %v347 = vmul.f32 %v339, %v337
    %v348 = vadd.f32 %v302, %v340
    %v349 = vadd.f32 %v303, %v341
    %v350 = vadd.f32 %v304, %v342
    %v351 = vadd.f32 %v305, %v343
    %v352 = vadd.f32 %v306, %v344
    %v353 = vadd.f32 %v307, %v345
    %v354 = vadd.f32 %v308, %v346
    %v355 = vadd.f32 %v309, %v347
    %s356 = sld [smem:[#allocation7 + $0x6]]
    %v357 = vstv %s356
    %v358 = vmul.f32 %v357, %v72
    %v359 = vmul.f32 %v357, %v73
    %v360 = vmul.f32 %v357, %v74
    %v361 = vmul.f32 %v357, %v75
    %v362 = vmul.f32 %v357, %v76
    %v363 = vmul.f32 %v357, %v77
    %v364 = vmul.f32 %v357, %v78
    %v365 = vmul.f32 %v357, %v79
    %s366 = sld [smem:[#allocation8 + $0x6]]
    %v367 = vstv %s366
    %v368 = vadd.f32 %v358, %v367
    %v369 = vadd.f32 %v359, %v367
    %v370 = vadd.f32 %v360, %v367
    %v371 = vadd.f32 %v361, %v367
    %v372 = vadd.f32 %v362, %v367
    %v373 = vadd.f32 %v363, %v367
    %v374 = vadd.f32 %v364, %v367
    %v375 = vadd.f32 %v365, %v367
    %v376 = vmax.f32 %v368, 0.0
    %v377 = vmax.f32 %v369, 0.0
    %v378 = vmax.f32 %v370, 0.0
    %v379 = vmax.f32 %v371, 0.0
    %v380 = vmax.f32 %v372, 0.0
    %v381 = vmax.f32 %v373, 0.0
    %v382 = vmax.f32 %v374, 0.0
    %v383 = vmax.f32 %v375, 0.0
    %s384 = sld [smem:[#allocation10 + $0x6]]
    %v385 = vstv %s384
    %v386 = vmul.f32 %v385, %v376
    %v387 = vmul.f32 %v385, %v377
    %v388 = vmul.f32 %v385, %v378
    %v389 = vmul.f32 %v385, %v379
    %v390 = vmul.f32 %v385, %v380
    %v391 = vmul.f32 %v385, %v381
    %v392 = vmul.f32 %v385, %v382
    %v393 = vmul.f32 %v385, %v383
    %v394 = vadd.f32 %v348, %v386
    %v395 = vadd.f32 %v349, %v387
    %v396 = vadd.f32 %v350, %v388
    %v397 = vadd.f32 %v351, %v389
    %v398 = vadd.f32 %v352, %v390
    %v399 = vadd.f32 %v353, %v391
    %v400 = vadd.f32 %v354, %v392
    %v401 = vadd.f32 %v355, %v393
    %s402 = sld [smem:[#allocation7 + $0x7]]
    %v403 = vstv %s402
    %v404 = vmul.f32 %v403, %v72
    %v405 = vmul.f32 %v403, %v73
    %v406 = vmul.f32 %v403, %v74
    %v407 = vmul.f32 %v403, %v75
    %v408 = vmul.f32 %v403, %v76
    %v409 = vmul.f32 %v403, %v77
    %v410 = vmul.f32 %v403, %v78
    %v411 = vmul.f32 %v403, %v79
    %s412 = sld [smem:[#allocation8 + $0x7]]
    %v413 = vstv %s412
    %v414 = vadd.f32 %v404, %v413
    %v415 = vadd.f32 %v405, %v413
    %v416 = vadd.f32 %v406, %v413
    %v417 = vadd.f32 %v407, %v413
    %v418 = vadd.f32 %v408, %v413
    %v419 = vadd.f32 %v409, %v413
    %v420 = vadd.f32 %v410, %v413
    %v421 = vadd.f32 %v411, %v413
    %v422 = vmax.f32 %v414, 0.0
    %v423 = vmax.f32 %v415, 0.0
    %v424 = vmax.f32 %v416, 0.0
    %v425 = vmax.f32 %v417, 0.0
    %v426 = vmax.f32 %v418, 0.0
    %v427 = vmax.f32 %v419, 0.0
    %v428 = vmax.f32 %v420, 0.0
    %v429 = vmax.f32 %v421, 0.0
    %s430 = sld [smem:[#allocation10 + $0x7]]
    %v431 = vstv %s430
    %v432 = vmul.f32 %v431, %v422
    %v433 = vmul.f32 %v431, %v423
    %v434 = vmul.f32 %v431, %v424
    %v435 = vmul.f32 %v431, %v425
    %v436 = vmul.f32 %v431, %v426
    %v437 = vmul.f32 %v431, %v427
    %v438 = vmul.f32 %v431, %v428
    %v439 = vmul.f32 %v431, %v429
    %v440 = vadd.f32 %v394, %v432
    %v441 = vadd.f32 %v395, %v433
    %v442 = vadd.f32 %v396, %v434
    %v443 = vadd.f32 %v397, %v435
    %v444 = vadd.f32 %v398, %v436
    %v445 = vadd.f32 %v399, %v437
    %v446 = vadd.f32 %v400, %v438
    %v447 = vadd.f32 %v401, %v439
    %s448 = sld [smem:[#allocation7 + $0x8]]
    %v449 = vstv %s448
    %v450 = vmul.f32 %v449, %v72
    %v451 = vmul.f32 %v449, %v73
    %v452 = vmul.f32 %v449, %v74
    %v453 = vmul.f32 %v449, %v75
    %v454 = vmul.f32 %v449, %v76
    %v455 = vmul.f32 %v449, %v77
    %v456 = vmul.f32 %v449, %v78
    %v457 = vmul.f32 %v449, %v79
    %s458 = sld [smem:[#allocation8 + $0x8]]
    %v459 = vstv %s458
    %v460 = vadd.f32 %v450, %v459
    %v461 = vadd.f32 %v451, %v459
    %v462 = vadd.f32 %v452, %v459
    %v463 = vadd.f32 %v453, %v459
    %v464 = vadd.f32 %v454, %v459
    %v465 = vadd.f32 %v455, %v459
    %v466 = vadd.f32 %v456, %v459
    %v467 = vadd.f32 %v457, %v459
    %v468 = vmax.f32 %v460, 0.0
    %v469 = vmax.f32 %v461, 0.0
    %v470 = vmax.f32 %v462, 0.0
    %v471 = vmax.f32 %v463, 0.0
    %v472 = vmax.f32 %v464, 0.0
    %v473 = vmax.f32 %v465, 0.0
    %v474 = vmax.f32 %v466, 0.0
    %v475 = vmax.f32 %v467, 0.0
    %s476 = sld [smem:[#allocation10 + $0x8]]
    %v477 = vstv %s476
    %v478 = vmul.f32 %v477, %v468
    %v479 = vmul.f32 %v477, %v469
    %v480 = vmul.f32 %v477, %v470
    %v481 = vmul.f32 %v477, %v471
    %v482 = vmul.f32 %v477, %v472
    %v483 = vmul.f32 %v477, %v473
    %v484 = vmul.f32 %v477, %v474
    %v485 = vmul.f32 %v477, %v475
    %v486 = vadd.f32 %v440, %v478
    %v487 = vadd.f32 %v441, %v479
    %v488 = vadd.f32 %v442, %v480
    %v489 = vadd.f32 %v443, %v481
    %v490 = vadd.f32 %v444, %v482
    %v491 = vadd.f32 %v445, %v483
    %v492 = vadd.f32 %v446, %v484
    %v493 = vadd.f32 %v447, %v485
    %s494 = sld [smem:[#allocation7 + $0x9]]
    %v495 = vstv %s494
    %v496 = vmul.f32 %v495, %v72
    %v497 = vmul.f32 %v495, %v73
    %v498 = vmul.f32 %v495, %v74
    %v499 = vmul.f32 %v495, %v75
    %v500 = vmul.f32 %v495, %v76
    %v501 = vmul.f32 %v495, %v77
    %v502 = vmul.f32 %v495, %v78
    %v503 = vmul.f32 %v495, %v79
    %s504 = sld [smem:[#allocation8 + $0x9]]
    %v505 = vstv %s504
    %v506 = vadd.f32 %v496, %v505
    %v507 = vadd.f32 %v497, %v505
    %v508 = vadd.f32 %v498, %v505
    %v509 = vadd.f32 %v499, %v505
    %v510 = vadd.f32 %v500, %v505
    %v511 = vadd.f32 %v501, %v505
    %v512 = vadd.f32 %v502, %v505
    %v513 = vadd.f32 %v503, %v505
    %v514 = vmax.f32 %v506, 0.0
    %v515 = vmax.f32 %v507, 0.0
    %v516 = vmax.f32 %v508, 0.0
    %v517 = vmax.f32 %v509, 0.0
    %v518 = vmax.f32 %v510, 0.0
    %v519 = vmax.f32 %v511, 0.0
    %v520 = vmax.f32 %v512, 0.0
    %v521 = vmax.f32 %v513, 0.0
    %s522 = sld [smem:[#allocation10 + $0x9]]
    %v523 = vstv %s522
    %v524 = vmul.f32 %v523, %v514
    %v525 = vmul.f32 %v523, %v515
    %v526 = vmul.f32 %v523, %v516
    %v527 = vmul.f32 %v523, %v517
    %v528 = vmul.f32 %v523, %v518
    %v529 = vmul.f32 %v523, %v519
    %v530 = vmul.f32 %v523, %v520
    %v531 = vmul.f32 %v523, %v521
    %v532 = vadd.f32 %v486, %v524
    %v533 = vadd.f32 %v487, %v525
    %v534 = vadd.f32 %v488, %v526
    %v535 = vadd.f32 %v489, %v527
    %v536 = vadd.f32 %v490, %v528
    %v537 = vadd.f32 %v491, %v529
    %v538 = vadd.f32 %v492, %v530
    %v539 = vadd.f32 %v493, %v531
    %s540 = sld [smem:[#allocation2]]
    %v541 = vstv %s540
    %v542 = vadd.f32 %v532, %v541
    %v543 = vadd.f32 %v533, %v541
    %v544 = vadd.f32 %v534, %v541
    %v545 = vadd.f32 %v535, %v541
    %v546 = vadd.f32 %v536, %v541
    %v547 = vadd.f32 %v537, %v541
    %v548 = vadd.f32 %v538, %v541
    %v549 = vadd.f32 %v539, %v541
    %550 = vst [vmem:[#allocation11] sm:$0xff] %v542
    %551 = vst [vmem:[#allocation11 + $0x8] sm:$0xff] %v543
    %552 = vst [vmem:[#allocation11 + $0x10] sm:$0xff] %v544
    %553 = vst [vmem:[#allocation11 + $0x18] sm:$0xff] %v545
    %554 = vst [vmem:[#allocation11 + $0x20] sm:$0xff] %v546
    %555 = vst [vmem:[#allocation11 + $0x28] sm:$0xff] %v547
    %556 = vst [vmem:[#allocation11 + $0x30] sm:$0xff] %v548
    %557 = vst [vmem:[#allocation11 + $0x38] sm:$0xff] %v549
    // Predicated region
    $region38: #{tpu_custom_call.1} parent=1 // pred_check
      _
    $region39: #{tpu_custom_call.1} parent=1 // pred_check_branch
      %559 = sbr.rel (0) target = $region41
    $region40: #{tpu_custom_call.1} parent=1 // pred_region
      %561 = vsyncadd [#allocation5], 0
      %s563 = sshll.u32 [#allocation11], 4
      %s564 = int_to_ptr.vmem [resolvable:$true] %s563
      %s565 = sshll.u32 %s5, 4
      %s566 = int_to_ptr.hbm [resolvable:$true] %s565
      %568 = dma.vmem_to_hbm [thread:$0]  %s564, 1024, %s566, [#allocation5]
    $region41: #{tpu_custom_call.1} parent=1 // pred_fallthru
      _
    // Predicated region
    $region42: #{tpu_custom_call.1} parent=1 // pred_check
      _
    $region43: #{tpu_custom_call.1} parent=1 // pred_check_branch
      %570 = sbr.rel (0) target = $region45
    $region44: #{tpu_custom_call.1} parent=1 // pred_region
      %572 = dma.done [#allocation5], 1024
    $region45: #{tpu_custom_call.1} parent=1 // pred_fallthru
      _
    %573 = vsyncpa [#allocation4], 1
    %574 = vsyncpa [#allocation5], 1
    %575 = vsyncpa [#allocation6], 1
    %576 = vsyncpa [#allocation9], 1

</llo_original>
